<compile_context>
chip_gen: v6e
topology: v6e:2x2x1
jax: 0.10.0
libtpu: 0.0.40
codegen_flags: <defaults>
</compile_context>

<pallas_src>
import jax
import jax.numpy as jnp
from jax.experimental import pallas as pl
from jax.experimental.pallas import tpu as pltpu

LN_EPS = 1e-5  # torch.nn.LayerNorm default


def _round_up(x, m):
    return (x + m - 1) // m * m


def _layernorm_fm(h, gamma_col, beta_col):
    """Feature-major LayerNorm: normalize over axis 0 (features, on sublanes).

    h:         [F, TB]  (batch on the lane axis)
    gamma_col: [F, 1]
    beta_col:  [F, 1]
    """
    mu = jnp.mean(h, axis=0, keepdims=True)        # [1, TB]  sublane reduce
    ms = jnp.mean(h * h, axis=0, keepdims=True)    # [1, TB]  independent reduce
    var = jnp.maximum(ms - mu * mu, 0.0)           # clamp guards cancellation
    inv = jax.lax.rsqrt(var + LN_EPS)              # [1, TB]
    return (h - mu) * inv * gamma_col + beta_col


def _r_critic_kernel(x_ref, ln0_ref, w1_ref, w2_ref, hp_ref, wv_ref, bv_ref,
                     out_ref):
    x = x_ref[...]                                               # [D, TB] f32

    # ---- MLPBase feature_norm: LayerNorm(obs_dim) ----
    h = _layernorm_fm(x, ln0_ref[:, 0:1], ln0_ref[:, 1:2])

    # ---- fc1: Linear(D, H) -> ReLU -> LayerNorm(H) ----  (h = W1 @ h)
    h = jnp.dot(w1_ref[...], h, preferred_element_type=jnp.float32) + hp_ref[:, 0:1]
    h = jnp.maximum(h, 0.0)
    h = _layernorm_fm(h, hp_ref[:, 1:2], hp_ref[:, 2:3])

    # ---- fc2 (layer_N = 1): Linear(H, H) -> ReLU -> LayerNorm(H) ----
    h = jnp.dot(w2_ref[...], h, preferred_element_type=jnp.float32) + hp_ref[:, 3:4]
    h = jnp.maximum(h, 0.0)
    h = _layernorm_fm(h, hp_ref[:, 4:5], hp_ref[:, 5:6])

    # ---- v_out: Linear(H, 1), lane-dense:  (1,H) @ (H,TB) -> (1,TB) ----
    v = jnp.dot(wv_ref[...], h, preferred_element_type=jnp.float32)
    out_ref[...] = v + bv_ref[0]                                 # [1, TB]


def r_critic_forward(cent_obs, params, *, block_rows=4096):
    """cent_obs: [B, obs_dim] float32. Returns values [B, 1] float32."""
    cent_obs = jnp.asarray(cent_obs, jnp.float32)
    B, D = cent_obs.shape
    H = params["w1"].shape[1]

    # Batch tile (lane axis): multiple of 128, big enough to amortize the
    # per-grid-step pipeline overhead, capped so the grid has >= 2 steps when
    # the batch spans more than one minimal tile (lets v7x use both TCs).
    B128 = _round_up(B, 128)
    TB = _round_up(block_rows, 128)
    if B128 > 128:
        TB = min(TB, _round_up(pl.cdiv(B128, 2), 128))
    TB = min(TB, B128)
    Bp = _round_up(B, TB)
    G = Bp // TB

    # Pad batch, then go feature-major: x_t is [D, Bp] with batch on lanes.
    x = cent_obs if Bp == B else jnp.pad(cent_obs, ((0, Bp - B), (0, 0)))
    x_t = x.T                                                     # [D, Bp]

    # Transposed weights so each layer is h = W @ h (no in-kernel transposes).
    w1_t = params["w1"].T                                         # [H, D]
    w2_t = params["w2"].T                                         # [H, H]
    wv_row = params["wv"].reshape(1, H)                           # [1, H]

    # Tiny per-layer vectors packed column-wise so they broadcast over lanes.
    ln0 = jnp.stack([params["ln0_g"], params["ln0_b"]], axis=1)   # [D, 2]
    hpack = jnp.stack([params["b1"], params["ln1_g"], params["ln1_b"],
                       params["b2"], params["ln2_g"], params["ln2_b"]],
                      axis=1)                                     # [H, 6]
    bv = params["bv"].reshape(1)                                  # [1] -> SMEM

    const2 = lambda i: (0, 0)
    out = pl.pallas_call(
        _r_critic_kernel,
        out_shape=jax.ShapeDtypeStruct((1, Bp), jnp.float32),
        grid=(G,),
        in_specs=[
            pl.BlockSpec((D, TB), lambda i: (0, i)),   # pipelined batch tile
            pl.BlockSpec((D, 2), const2),              # resident LN0 params
            pl.BlockSpec((H, D), const2),              # resident w1^T
            pl.BlockSpec((H, H), const2),              # resident w2^T
            pl.BlockSpec((H, 6), const2),              # resident packed vectors
            pl.BlockSpec((1, H), const2),              # resident v_out weight row
            pl.BlockSpec(memory_space=pltpu.MemorySpace.SMEM),  # bv scalar
        ],
        out_specs=pl.BlockSpec((1, TB), lambda i: (0, i)),        # lane-dense
        compiler_params=pltpu.CompilerParams(
            dimension_semantics=("parallel",),
            vmem_limit_bytes=48 * 1024 * 1024,
        ),
    )(x_t, ln0, w1_t, w2_t, hpack, wv_row, bv)

    return out.reshape(Bp)[:B].reshape(B, 1)


def init_params(key, obs_dim, hidden):
    """Deterministic synthetic parameters (shapes match the torch module)."""
    ks = jax.random.split(key, 12)
    s1 = 1.0 / jnp.sqrt(jnp.float32(obs_dim))
    s2 = 1.0 / jnp.sqrt(jnp.float32(hidden))
    n = lambda k, shape, s=1.0: s * jax.random.normal(k, shape, jnp.float32)
    return {
        # feature_norm LayerNorm(obs_dim)  (perturbed from 1/0 to strengthen the check)
        "ln0_g": 1.0 + 0.1 * n(ks[0], (obs_dim,)),
        "ln0_b": 0.1 * n(ks[1], (obs_dim,)),
        # fc1: Linear(obs_dim, hidden) + LayerNorm(hidden)
        "w1":    n(ks[2], (obs_dim, hidden), s1),
        "b1":    0.1 * n(ks[3], (hidden,)),
        "ln1_g": 1.0 + 0.1 * n(ks[4], (hidden,)),
        "ln1_b": 0.1 * n(ks[5], (hidden,)),
        # fc2: Linear(hidden, hidden) + LayerNorm(hidden)
        "w2":    n(ks[6], (hidden, hidden), s2),
        "b2":    0.1 * n(ks[7], (hidden,)),
        "ln2_g": 1.0 + 0.1 * n(ks[8], (hidden,)),
        "ln2_b": 0.1 * n(ks[9], (hidden,)),
        # v_out: Linear(hidden, 1)
        "wv":    n(ks[10], (hidden,), s2),
        "bv":    0.1 * n(ks[11], ()),
    }


def r_critic_reference(cent_obs, p):
    """Pure-JAX reference (two-pass LayerNorm, exactly the torch formulation)."""
    def ln(h, g, b):
        mu = jnp.mean(h, axis=-1, keepdims=True)
        var = jnp.mean((h - mu) ** 2, axis=-1, keepdims=True)
        return (h - mu) * jax.lax.rsqrt(var + LN_EPS) * g + b
    h = ln(cent_obs, p["ln0_g"], p["ln0_b"])
    h = jnp.maximum(h @ p["w1"] + p["b1"], 0.0)
    h = ln(h, p["ln1_g"], p["ln1_b"])
    h = jnp.maximum(h @ p["w2"] + p["b2"], 0.0)
    h = ln(h, p["ln2_g"], p["ln2_b"])
    return h @ p["wv"][:, None] + p["bv"]


if __name__ == "__main__":
    key = jax.random.PRNGKey(0)
    k_obs, k_par, k_obs2, k_obs3 = jax.random.split(key, 4)

    B, OBS_DIM, HIDDEN = 8, 16, 32
    params = init_params(k_par, OBS_DIM, HIDDEN)

    # Small single-tile run.
    cent_obs = jax.random.normal(k_obs, (B, OBS_DIM), jnp.float32)
    values = jax.block_until_ready(r_critic_forward(cent_obs, params))
    ref = r_critic_reference(cent_obs, params)
    assert values.shape == (B, 1)
    assert jnp.allclose(values, ref, atol=1e-3, rtol=1e-3)

    # Multi-tile grid run (exercises padding + pipelined batch tiling).
    B2 = 300
    cent_obs2 = jax.random.normal(k_obs2, (B2, OBS_DIM), jnp.float32)
    values2 = jax.block_until_ready(
        r_critic_forward(cent_obs2, params, block_rows=128))
    ref2 = r_critic_reference(cent_obs2, params)
    assert values2.shape == (B2, 1)
    assert jnp.allclose(values2, ref2, atol=1e-3, rtol=1e-3)

    # Default tiling with a medium batch (exercises the >=2-step TB cap).
    B3 = 1000
    cent_obs3 = jax.random.normal(k_obs3, (B3, OBS_DIM), jnp.float32)
    values3 = jax.block_until_ready(r_critic_forward(cent_obs3, params))
    ref3 = r_critic_reference(cent_obs3, params)
    assert values3.shape == (B3, 1)
    assert jnp.allclose(values3, ref3, atol=1e-3, rtol=1e-3)

    print("KERNEL_OK")
</pallas_src>

<mosaic_0001>
module attributes {stable_mosaic.version = 11 : i64} {
  func.func @_r_critic_kernel(%arg0: i32, %arg1: memref<16x128xf32, #tpu.memory_space<vmem>>, %arg2: memref<16x2xf32, #tpu.memory_space<vmem>>, %arg3: memref<32x16xf32, #tpu.memory_space<vmem>>, %arg4: memref<32x32xf32, #tpu.memory_space<vmem>>, %arg5: memref<32x6xf32, #tpu.memory_space<vmem>>, %arg6: memref<1x32xf32, #tpu.memory_space<vmem>>, %arg7: memref<1xf32, #tpu.memory_space<smem>>, %arg8: memref<1x128xf32, #tpu.memory_space<vmem>>) attributes {dimension_semantics = [#tpu.dimension_semantics<parallel>], iteration_bounds = array<i64: 1>, scalar_prefetch = 0 : i64, scratch_operands = 0 : i64, tpu.core_type = #tpu.core_type<tc>, window_params = [{transform_indices = @transform_0, window_bounds = array<i64: 16, 128>}, {pipeline_mode = #tpu.pipeline_mode<synchronous>, transform_indices = @transform_1, window_bounds = array<i64: 16, 2>}, {pipeline_mode = #tpu.pipeline_mode<synchronous>, transform_indices = @transform_2, window_bounds = array<i64: 32, 16>}, {pipeline_mode = #tpu.pipeline_mode<synchronous>, transform_indices = @transform_3, window_bounds = array<i64: 32, 32>}, {pipeline_mode = #tpu.pipeline_mode<synchronous>, transform_indices = @transform_4, window_bounds = array<i64: 32, 6>}, {pipeline_mode = #tpu.pipeline_mode<synchronous>, transform_indices = @transform_5, window_bounds = array<i64: 1, 32>}, {transform_indices = @transform_6, window_bounds = array<i64: 1>}, {transform_indices = @transform_7, window_bounds = array<i64: 1, 128>}]} {
    %c0 = arith.constant 0 : index
    %c0_0 = arith.constant 0 : index
    %0 = vector.load %arg1[%c0, %c0_0] : memref<16x128xf32, #tpu.memory_space<vmem>>, vector<16x128xf32>
    %c0_1 = arith.constant 0 : index
    %c0_2 = arith.constant 0 : index
    %1 = vector.load %arg2[%c0_1, %c0_2] : memref<16x2xf32, #tpu.memory_space<vmem>>, vector<16x1xf32>
    %c0_3 = arith.constant 0 : index
    %c1 = arith.constant 1 : index
    %2 = vector.load %arg2[%c0_3, %c1] : memref<16x2xf32, #tpu.memory_space<vmem>>, vector<16x1xf32>
    %cst = arith.constant dense<0.000000e+00> : vector<128xf32>
    %3 = vector.multi_reduction <add>, %0, %cst [0] : vector<16x128xf32> to vector<128xf32>
    %4 = vector.shape_cast %3 : vector<128xf32> to vector<1x128xf32>
    %cst_4 = arith.constant 1.600000e+01 : f32
    %5 = vector.broadcast %cst_4 : f32 to vector<1x128xf32>
    %6 = arith.divf %4, %5 : vector<1x128xf32>
    %7 = arith.mulf %0, %0 : vector<16x128xf32>
    %cst_5 = arith.constant dense<0.000000e+00> : vector<128xf32>
    %8 = vector.multi_reduction <add>, %7, %cst_5 [0] : vector<16x128xf32> to vector<128xf32>
    %9 = vector.shape_cast %8 : vector<128xf32> to vector<1x128xf32>
    %cst_6 = arith.constant 1.600000e+01 : f32
    %10 = vector.broadcast %cst_6 : f32 to vector<1x128xf32>
    %11 = arith.divf %9, %10 : vector<1x128xf32>
    %12 = arith.mulf %6, %6 : vector<1x128xf32>
    %13 = arith.subf %11, %12 : vector<1x128xf32>
    %cst_7 = arith.constant 0.000000e+00 : f32
    %14 = vector.broadcast %cst_7 : f32 to vector<1x128xf32>
    %15 = arith.maximumf %13, %14 : vector<1x128xf32>
    %cst_8 = arith.constant 9.99999974E-6 : f32
    %16 = vector.broadcast %cst_8 : f32 to vector<1x128xf32>
    %17 = arith.addf %15, %16 : vector<1x128xf32>
    %18 = math.rsqrt %17 : vector<1x128xf32>
    %19 = vector.broadcast %6 : vector<1x128xf32> to vector<16x128xf32>
    %20 = arith.subf %0, %19 : vector<16x128xf32>
    %21 = vector.broadcast %18 : vector<1x128xf32> to vector<16x128xf32>
    %22 = arith.mulf %20, %21 : vector<16x128xf32>
    %23 = vector.broadcast %1 : vector<16x1xf32> to vector<16x128xf32>
    %24 = arith.mulf %22, %23 : vector<16x128xf32>
    %25 = vector.broadcast %2 : vector<16x1xf32> to vector<16x128xf32>
    %26 = arith.addf %24, %25 : vector<16x128xf32>
    %c0_9 = arith.constant 0 : index
    %c0_10 = arith.constant 0 : index
    %27 = vector.load %arg3[%c0_9, %c0_10] : memref<32x16xf32, #tpu.memory_space<vmem>>, vector<32x16xf32>
    %cst_11 = arith.constant dense<0.000000e+00> : vector<32x128xf32>
    %28 = tpu.matmul %27, %26, %cst_11 {dimension_numbers = #tpu.dot_dimension_numbers<[1], [0], [0], [1], [0, 0, 1, 1], [], []>} : vector<32x16xf32>, vector<16x128xf32>, vector<32x128xf32> -> vector<32x128xf32>
    %c0_12 = arith.constant 0 : index
    %c0_13 = arith.constant 0 : index
    %29 = vector.load %arg5[%c0_12, %c0_13] : memref<32x6xf32, #tpu.memory_space<vmem>>, vector<32x1xf32>
    %30 = vector.broadcast %29 : vector<32x1xf32> to vector<32x128xf32>
    %31 = arith.addf %28, %30 : vector<32x128xf32>
    %cst_14 = arith.constant 0.000000e+00 : f32
    %32 = vector.broadcast %cst_14 : f32 to vector<32x128xf32>
    %33 = arith.maximumf %31, %32 : vector<32x128xf32>
    %c0_15 = arith.constant 0 : index
    %c1_16 = arith.constant 1 : index
    %34 = vector.load %arg5[%c0_15, %c1_16] : memref<32x6xf32, #tpu.memory_space<vmem>>, vector<32x1xf32>
    %c0_17 = arith.constant 0 : index
    %c2 = arith.constant 2 : index
    %35 = vector.load %arg5[%c0_17, %c2] : memref<32x6xf32, #tpu.memory_space<vmem>>, vector<32x1xf32>
    %cst_18 = arith.constant dense<0.000000e+00> : vector<128xf32>
    %36 = vector.multi_reduction <add>, %33, %cst_18 [0] : vector<32x128xf32> to vector<128xf32>
    %37 = vector.shape_cast %36 : vector<128xf32> to vector<1x128xf32>
    %cst_19 = arith.constant 3.200000e+01 : f32
    %38 = vector.broadcast %cst_19 : f32 to vector<1x128xf32>
    %39 = arith.divf %37, %38 : vector<1x128xf32>
    %40 = arith.mulf %33, %33 : vector<32x128xf32>
    %cst_20 = arith.constant dense<0.000000e+00> : vector<128xf32>
    %41 = vector.multi_reduction <add>, %40, %cst_20 [0] : vector<32x128xf32> to vector<128xf32>
    %42 = vector.shape_cast %41 : vector<128xf32> to vector<1x128xf32>
    %cst_21 = arith.constant 3.200000e+01 : f32
    %43 = vector.broadcast %cst_21 : f32 to vector<1x128xf32>
    %44 = arith.divf %42, %43 : vector<1x128xf32>
    %45 = arith.mulf %39, %39 : vector<1x128xf32>
    %46 = arith.subf %44, %45 : vector<1x128xf32>
    %cst_22 = arith.constant 0.000000e+00 : f32
    %47 = vector.broadcast %cst_22 : f32 to vector<1x128xf32>
    %48 = arith.maximumf %46, %47 : vector<1x128xf32>
    %cst_23 = arith.constant 9.99999974E-6 : f32
    %49 = vector.broadcast %cst_23 : f32 to vector<1x128xf32>
    %50 = arith.addf %48, %49 : vector<1x128xf32>
    %51 = math.rsqrt %50 : vector<1x128xf32>
    %52 = vector.broadcast %39 : vector<1x128xf32> to vector<32x128xf32>
    %53 = arith.subf %33, %52 : vector<32x128xf32>
    %54 = vector.broadcast %51 : vector<1x128xf32> to vector<32x128xf32>
    %55 = arith.mulf %53, %54 : vector<32x128xf32>
    %56 = vector.broadcast %34 : vector<32x1xf32> to vector<32x128xf32>
    %57 = arith.mulf %55, %56 : vector<32x128xf32>
    %58 = vector.broadcast %35 : vector<32x1xf32> to vector<32x128xf32>
    %59 = arith.addf %57, %58 : vector<32x128xf32>
    %c0_24 = arith.constant 0 : index
    %c0_25 = arith.constant 0 : index
    %60 = vector.load %arg4[%c0_24, %c0_25] : memref<32x32xf32, #tpu.memory_space<vmem>>, vector<32x32xf32>
    %cst_26 = arith.constant dense<0.000000e+00> : vector<32x128xf32>
    %61 = tpu.matmul %60, %59, %cst_26 {dimension_numbers = #tpu.dot_dimension_numbers<[1], [0], [0], [1], [0, 0, 1, 1], [], []>} : vector<32x32xf32>, vector<32x128xf32>, vector<32x128xf32> -> vector<32x128xf32>
    %c0_27 = arith.constant 0 : index
    %c3 = arith.constant 3 : index
    %62 = vector.load %arg5[%c0_27, %c3] : memref<32x6xf32, #tpu.memory_space<vmem>>, vector<32x1xf32>
    %63 = vector.broadcast %62 : vector<32x1xf32> to vector<32x128xf32>
    %64 = arith.addf %61, %63 : vector<32x128xf32>
    %cst_28 = arith.constant 0.000000e+00 : f32
    %65 = vector.broadcast %cst_28 : f32 to vector<32x128xf32>
    %66 = arith.maximumf %64, %65 : vector<32x128xf32>
    %c0_29 = arith.constant 0 : index
    %c4 = arith.constant 4 : index
    %67 = vector.load %arg5[%c0_29, %c4] : memref<32x6xf32, #tpu.memory_space<vmem>>, vector<32x1xf32>
    %c0_30 = arith.constant 0 : index
    %c5 = arith.constant 5 : index
    %68 = vector.load %arg5[%c0_30, %c5] : memref<32x6xf32, #tpu.memory_space<vmem>>, vector<32x1xf32>
    %cst_31 = arith.constant dense<0.000000e+00> : vector<128xf32>
    %69 = vector.multi_reduction <add>, %66, %cst_31 [0] : vector<32x128xf32> to vector<128xf32>
    %70 = vector.shape_cast %69 : vector<128xf32> to vector<1x128xf32>
    %cst_32 = arith.constant 3.200000e+01 : f32
    %71 = vector.broadcast %cst_32 : f32 to vector<1x128xf32>
    %72 = arith.divf %70, %71 : vector<1x128xf32>
    %73 = arith.mulf %66, %66 : vector<32x128xf32>
    %cst_33 = arith.constant dense<0.000000e+00> : vector<128xf32>
    %74 = vector.multi_reduction <add>, %73, %cst_33 [0] : vector<32x128xf32> to vector<128xf32>
    %75 = vector.shape_cast %74 : vector<128xf32> to vector<1x128xf32>
    %cst_34 = arith.constant 3.200000e+01 : f32
    %76 = vector.broadcast %cst_34 : f32 to vector<1x128xf32>
    %77 = arith.divf %75, %76 : vector<1x128xf32>
    %78 = arith.mulf %72, %72 : vector<1x128xf32>
    %79 = arith.subf %77, %78 : vector<1x128xf32>
    %cst_35 = arith.constant 0.000000e+00 : f32
    %80 = vector.broadcast %cst_35 : f32 to vector<1x128xf32>
    %81 = arith.maximumf %79, %80 : vector<1x128xf32>
    %cst_36 = arith.constant 9.99999974E-6 : f32
    %82 = vector.broadcast %cst_36 : f32 to vector<1x128xf32>
    %83 = arith.addf %81, %82 : vector<1x128xf32>
    %84 = math.rsqrt %83 : vector<1x128xf32>
    %85 = vector.broadcast %72 : vector<1x128xf32> to vector<32x128xf32>
    %86 = arith.subf %66, %85 : vector<32x128xf32>
    %87 = vector.broadcast %84 : vector<1x128xf32> to vector<32x128xf32>
    %88 = arith.mulf %86, %87 : vector<32x128xf32>
    %89 = vector.broadcast %67 : vector<32x1xf32> to vector<32x128xf32>
    %90 = arith.mulf %88, %89 : vector<32x128xf32>
    %91 = vector.broadcast %68 : vector<32x1xf32> to vector<32x128xf32>
    %92 = arith.addf %90, %91 : vector<32x128xf32>
    %c0_37 = arith.constant 0 : index
    %c0_38 = arith.constant 0 : index
    %93 = vector.load %arg6[%c0_37, %c0_38] : memref<1x32xf32, #tpu.memory_space<vmem>>, vector<1x32xf32>
    %cst_39 = arith.constant dense<0.000000e+00> : vector<1x128xf32>
    %94 = tpu.matmul %93, %92, %cst_39 {dimension_numbers = #tpu.dot_dimension_numbers<[1], [0], [0], [1], [0, 0, 1, 1], [], []>} : vector<1x32xf32>, vector<32x128xf32>, vector<1x128xf32> -> vector<1x128xf32>
    %c0_40 = arith.constant 0 : index
    %95 = memref.load %arg7[%c0_40] : memref<1xf32, #tpu.memory_space<smem>>
    %96 = vector.broadcast %95 : f32 to vector<1x128xf32>
    %97 = arith.addf %94, %96 : vector<1x128xf32>
    %c0_41 = arith.constant 0 : index
    %c0_42 = arith.constant 0 : index
    %98 = vector.load %arg8[%c0_41, %c0_42] : memref<1x128xf32, #tpu.memory_space<vmem>>, vector<1x128xf32>
    tpu.vector_store %arg8[%c0_41, %c0_42], %97 {strides = array<i32>} : memref<1x128xf32, #tpu.memory_space<vmem>>, vector<1x128xf32>,
    return
  }
  func.func @transform_0(%arg0: i32) -> (i32, i32) {
    %c0_i32 = arith.constant 0 : i32
    %c0_i32_0 = arith.constant 0 : i32
    return %c0_i32, %arg0 : i32, i32
  }
  func.func @transform_1(%arg0: i32) -> (i32, i32) {
    %c0_i32 = arith.constant 0 : i32
    %c0_i32_0 = arith.constant 0 : i32
    %c0_i32_1 = arith.constant 0 : i32
    return %c0_i32, %c0_i32_0 : i32, i32
  }
  func.func @transform_2(%arg0: i32) -> (i32, i32) {
    %c0_i32 = arith.constant 0 : i32
    %c0_i32_0 = arith.constant 0 : i32
    %c0_i32_1 = arith.constant 0 : i32
    return %c0_i32, %c0_i32_0 : i32, i32
  }
  func.func @transform_3(%arg0: i32) -> (i32, i32) {
    %c0_i32 = arith.constant 0 : i32
    %c0_i32_0 = arith.constant 0 : i32
    %c0_i32_1 = arith.constant 0 : i32
    return %c0_i32, %c0_i32_0 : i32, i32
  }
  func.func @transform_4(%arg0: i32) -> (i32, i32) {
    %c0_i32 = arith.constant 0 : i32
    %c0_i32_0 = arith.constant 0 : i32
    %c0_i32_1 = arith.constant 0 : i32
    return %c0_i32, %c0_i32_0 : i32, i32
  }
  func.func @transform_5(%arg0: i32) -> (i32, i32) {
    %c0_i32 = arith.constant 0 : i32
    %c0_i32_0 = arith.constant 0 : i32
    %c0_i32_1 = arith.constant 0 : i32
    return %c0_i32, %c0_i32_0 : i32, i32
  }
  func.func @transform_6(%arg0: i32) -> i32 {
    %c0_i32 = arith.constant 0 : i32
    %c0_i32_0 = arith.constant 0 : i32
    return %c0_i32 : i32
  }
  func.func @transform_7(%arg0: i32) -> (i32, i32) {
    %c0_i32 = arith.constant 0 : i32
    %c0_i32_0 = arith.constant 0 : i32
    return %c0_i32, %arg0 : i32, i32
  }
}

</mosaic_0001>

<llo_original>
// kernel: tpu_custom_call.1
$region0: #{tpu_custom_call.1}
  #allocation0 [shape = 'u32[]', space=smem, size = 0x4, offset = 0x4, fixed_abs, tag = 'smem constant byte address 0x4 - core index']
  #allocation1 [shape = 'u32[144,128]{1,0:T(1,128)}', space=vmem, size = 0x12000, scoped, tag = 'internal scratch']
  #allocation2 [shape = 'f32[1]{0:T(128)S(6)}', space=smem, size = 0x200, scoped, tag = 'scoped memory for tpu_custom_call.1']
  %s0 = inlined_call_operand.vmem [shape: f32[16,128], index: 0, kind: input, shape index: {}]
  %s1 = inlined_call_operand.vmem [shape: f32[16,2], index: 1, kind: input, shape index: {}]
  %s2 = inlined_call_operand.vmem [shape: f32[32,16], index: 2, kind: input, shape index: {}]
  %s3 = inlined_call_operand.vmem [shape: f32[32,32], index: 3, kind: input, shape index: {}]
  %s4 = inlined_call_operand.vmem [shape: f32[32,6], index: 4, kind: input, shape index: {}]
  %s5 = inlined_call_operand.vmem [shape: f32[1,32], index: 5, kind: input, shape index: {}]
  %s6 = inlined_call_operand.<no memory space> [shape: f32[1], index: 6, kind: input, shape index: {}]
  %s7 = inlined_call_operand.hbm [shape: f32[1,128], index: 7, kind: output, shape index: {}]
  %s8 = sld [smem:[#allocation0]]
  $region38: #{tpu_custom_call.1} parent=0
    _
  %s10 = ssub.s32 1, %s8
  %s11 = scalar_select 0, %s10, %s8
  %12 = sst [smem:[#allocation2]] %s6
  $region1: #{tpu_custom_call.1} parent=0
    #allocation3 [shape = 'u8[512]{0}', space=vmem, size = 0x400, scoped, tag = 'output window, operand 0, single buffered']
    #allocation4 [shape = 's32[1]{0}', space=sflag, size = 0x4, scoped, tag = 'scoped memory for tpu_custom_call.1']
    %13 = vsyncpa [#allocation4], 0
    // Predicated region
    $region2: #{tpu_custom_call.1} parent=1 // pred_check
      _
    $region3: #{tpu_custom_call.1} parent=1 // pred_check_branch
      %15 = sbr.rel (0) target = $region5
    $region4: #{tpu_custom_call.1} parent=1 // pred_region
      _
    $region5: #{tpu_custom_call.1} parent=1 // pred_fallthru
      _
    // Predicated region
    $region6: #{tpu_custom_call.1} parent=1 // pred_check
      _
    $region7: #{tpu_custom_call.1} parent=1 // pred_check_branch
      %17 = sbr.rel (0) target = $region9
    $region8: #{tpu_custom_call.1} parent=1 // pred_region
      _
    $region9: #{tpu_custom_call.1} parent=1 // pred_fallthru
      _
    // Predicated region
    $region10: #{tpu_custom_call.1} parent=1 // pred_check
      _
    $region11: #{tpu_custom_call.1} parent=1 // pred_check_branch
      %19 = sbr.rel (0) target = $region13
    $region12: #{tpu_custom_call.1} parent=1 // pred_region
      _
    $region13: #{tpu_custom_call.1} parent=1 // pred_fallthru
      _
    // Predicated region
    $region14: #{tpu_custom_call.1} parent=1 // pred_check
      _
    $region15: #{tpu_custom_call.1} parent=1 // pred_check_branch
      %21 = sbr.rel (0) target = $region17
    $region16: #{tpu_custom_call.1} parent=1 // pred_region
      _
    $region17: #{tpu_custom_call.1} parent=1 // pred_fallthru
      _
    // Predicated region
    $region18: #{tpu_custom_call.1} parent=1 // pred_check
      _
    $region19: #{tpu_custom_call.1} parent=1 // pred_check_branch
      %23 = sbr.rel (0) target = $region21
    $region20: #{tpu_custom_call.1} parent=1 // pred_region
      _
    $region21: #{tpu_custom_call.1} parent=1 // pred_fallthru
      _
    // Predicated region
    $region22: #{tpu_custom_call.1} parent=1 // pred_check
      _
    $region23: #{tpu_custom_call.1} parent=1 // pred_check_branch
      %25 = sbr.rel (0) target = $region25
    $region24: #{tpu_custom_call.1} parent=1 // pred_region
      _
    $region25: #{tpu_custom_call.1} parent=1 // pred_fallthru
      _
    // Predicated region
    $region26: #{tpu_custom_call.1} parent=1 // pred_check
      _
    $region27: #{tpu_custom_call.1} parent=1 // pred_check_branch
      %27 = sbr.rel (0) target = $region29
    $region28: #{tpu_custom_call.1} parent=1 // pred_region
      _
    $region29: #{tpu_custom_call.1} parent=1 // pred_fallthru
      _
    %v28 = vld [vmem:[%s0] sm:$0xff]
    %v29 = vld [vmem:[%s0 + $0x8] sm:$0xff]
    %v30 = vld [vmem:[%s1] sm:$0xff]
    %v31 = vld [vmem:[%s1 + $0x8] sm:$0xff]
    %v32 = vadd.f32 %v28, %v29
    %v33 = vrot.slane %v32, 4
    %v34 = vadd.f32 %v32, %v33
    %v35 = vrot.slane %v34, 2
    %v36 = vadd.f32 %v34, %v35
    %v37 = vrot.slane %v36, 1
    %v38 = vadd.f32 %v36, %v37
    %v39 = vrcp.pop 16.0
    %v40 = vmul.f32 %v38, %v39
    %v41 = vmul.f32 %v28, %v28
    %v42 = vmul.f32 %v29, %v29
    %v43 = vadd.f32 %v41, %v42
    %v44 = vrot.slane %v43, 4
    %v45 = vadd.f32 %v43, %v44
    %v46 = vrot.slane %v45, 2
    %v47 = vadd.f32 %v45, %v46
    %v48 = vrot.slane %v47, 1
    %v49 = vadd.f32 %v47, %v48
    %v50 = vmul.f32 %v49, %v39
    %v51 = vmul.f32 %v40, %v40
    %v52 = vsub.f32 %v50, %v51
    %v53 = vmax.f32 %v52, 0.0
    %v54 = vadd.f32 %v53, 1e-05
    %v55 = vrsqrt.pop %v54
    %v56 = vsub.f32 %v28, %v40
    %v57 = vsub.f32 %v29, %v40
    %v58 = vmul.f32 %v56, %v55
    %v59 = vmul.f32 %v57, %v55
    %61 = vset.pattern.permute.xlu0 0
    %62 = vperm.xlu0 %61, %v30
    %v63 = vpop.permute.xlu0 %62
    %66 = vset.pattern.permute.xlu0 0
    %67 = vperm.xlu0 %66, %v31
    %v68 = vpop.permute.xlu0 %67
    %v70 = vmul.f32 %v58, %v63
    %v71 = vmul.f32 %v59, %v68
    %72 = vset.pattern.permute.xlu0 1
    %73 = vperm.xlu0 %72, %v30
    %v74 = vpop.permute.xlu0 %73
    %76 = vset.pattern.permute.xlu0 1
    %77 = vperm.xlu0 %76, %v31
    %v78 = vpop.permute.xlu0 %77
    %v80 = vadd.f32 %v70, %v74
    %v81 = vadd.f32 %v71, %v78
    %v82 = vld [vmem:[%s2] sm:$0xff]
    %v83 = vld [vmem:[%s2 + $0x8] sm:$0xff]
    %v84 = vld [vmem:[%s2 + $0x10] sm:$0xff]
    %v85 = vld [vmem:[%s2 + $0x18] sm:$0xff]
    %v86 = vld [vmem:[%s4] sm:$0xff]
    %v87 = vld [vmem:[%s4 + $0x8] sm:$0xff]
    %v88 = vld [vmem:[%s4 + $0x10] sm:$0xff]
    %v89 = vld [vmem:[%s4 + $0x18] sm:$0xff]
    %91 = vset.pattern.permute.xlu0 0
    %92 = vperm.xlu0 %91, %v86
    %v93 = vpop.permute.xlu0 %92
    %96 = vset.pattern.permute.xlu0 0
    %97 = vperm.xlu0 %96, %v87
    %v98 = vpop.permute.xlu0 %97
    %101 = vset.pattern.permute.xlu0 0
    %102 = vperm.xlu0 %101, %v88
    %v103 = vpop.permute.xlu0 %102
    %106 = vset.pattern.permute.xlu0 0
    %107 = vperm.xlu0 %106, %v89
    %v108 = vpop.permute.xlu0 %107
    %vm110 = vcmask 130048
    %v112 = vsel %vm110, %v82, 0
    %v115 = vsel %vm110, %v83, 0
    %v118 = vsel %vm110, %v84, 0
    %v121 = vsel %vm110, %v85, 0
    %123 = vmatprep.subr.mxu0 0.0
    %124 = vmatpush1.msra.mxu0 0.0
    %125 = vmatprep.subr.mxu0 0.0
    %126 = vmatpush1.msra.mxu0 0.0
    %127 = vmatprep.subr.mxu0 0.0
    %128 = vmatpush1.msra.mxu0 0.0
    %129 = vmatprep.subr.mxu0 0.0
    %130 = vmatpush1.msra.mxu0 0.0
    %131 = vmatprep.subr.mxu0 0.0
    %132 = vmatpush1.msra.mxu0 0.0
    %133 = vmatprep.subr.mxu0 0.0
    %134 = vmatpush1.msra.mxu0 0.0
    %135 = vmatprep.subr.mxu0 0.0
    %136 = vmatpush1.msra.mxu0 0.0
    %137 = vmatprep.subr.mxu0 0.0
    %138 = vmatpush1.msra.mxu0 0.0
    %139 = vmatprep.subr.mxu0 0.0
    %140 = vmatpush1.msra.mxu0 0.0
    %141 = vmatprep.subr.mxu0 0.0
    %142 = vmatpush1.msra.mxu0 0.0
    %143 = vmatprep.subr.mxu0 0.0
    %144 = vmatpush1.msra.mxu0 0.0
    %145 = vmatprep.subr.mxu0 0.0
    %146 = vmatpush1.msra.mxu0 0.0
    %147 = vmatprep.subr.mxu0 0.0
    %148 = vmatpush1.msra.mxu0 0.0
    %149 = vmatprep.subr.mxu0 0.0
    %150 = vmatpush1.msra.mxu0 0.0
    %151 = vmatprep.subr.mxu0 0.0
    %152 = vmatpush1.msra.mxu0 %v81
    %153 = vmatprep.subr.mxu0 0.0
    %154 = vmatpush1.msra.mxu0 %v80
    %155 = vmatprep.subr.mxu0 0.0
    %156 = vmatpush2.msra.mxu0 0.0
    %157 = vmatprep.subr.mxu0 0.0
    %158 = vmatpush2.msra.mxu0 0.0
    %159 = vmatprep.subr.mxu0 0.0
    %160 = vmatpush2.msra.mxu0 0.0
    %161 = vmatprep.subr.mxu0 0.0
    %162 = vmatpush2.msra.mxu0 0.0
    %163 = vmatprep.subr.mxu0 0.0
    %164 = vmatpush2.msra.mxu0 0.0
    %165 = vmatprep.subr.mxu0 0.0
    %166 = vmatpush2.msra.mxu0 0.0
    %167 = vmatprep.subr.mxu0 0.0
    %168 = vmatpush2.msra.mxu0 0.0
    %169 = vmatprep.subr.mxu0 0.0
    %170 = vmatpush2.msra.mxu0 0.0
    %171 = vmatprep.subr.mxu0 0.0
    %172 = vmatpush2.msra.mxu0 0.0
    %173 = vmatprep.subr.mxu0 0.0
    %174 = vmatpush2.msra.mxu0 0.0
    %175 = vmatprep.subr.mxu0 0.0
    %176 = vmatpush2.msra.mxu0 0.0
    %177 = vmatprep.subr.mxu0 0.0
    %178 = vmatpush2.msra.mxu0 0.0
    %179 = vmatprep.subr.mxu0 0.0
    %180 = vmatpush2.msra.mxu0 0.0
    %181 = vmatprep.subr.mxu0 0.0
    %182 = vmatpush2.msra.mxu0 0.0
    %183 = vmatprep.subr.mxu0 0.0
    %184 = vmatpush2.msra.mxu0 0.0
    %185 = vmatprep.subr.mxu0 0.0
    %186 = vmatpush2.msra.mxu0 0.0
    %187 = vmatprep.mubr.f32.mxu0 0.0
    %188 = vmatmul.mubr.f32.gmra.mxu0 %v112
    %v189 = vpop.f32.mrf.mxu0
    %v190 = vadd.f32 %v93, %v189
    %v191 = vpop.f32.mrf.mxu0
    %192 = vmatprep.mubr.f32.mxu0 0.0
    %193 = vmatmul.mubr.f32.gmra.mxu0 %v115
    %v194 = vpop.f32.mrf.mxu0
    %v195 = vadd.f32 %v98, %v194
    %v196 = vpop.f32.mrf.mxu0
    %197 = vmatprep.mubr.f32.mxu0 0.0
    %198 = vmatmul.mubr.f32.gmra.mxu0 %v118
    %v199 = vpop.f32.mrf.mxu0
    %v200 = vadd.f32 %v103, %v199
    %v201 = vpop.f32.mrf.mxu0
    %202 = vmatprep.mubr.f32.mxu0 0.0
    %203 = vmatmul.mubr.f32.gmra.mxu0 %v121
    %v204 = vpop.f32.mrf.mxu0
    %v205 = vadd.f32 %v108, %v204
    %v206 = vpop.f32.mrf.mxu0
    %207 = vdwg.mxu0
    %v208 = vmax.f32 %v190, 0.0
    %v209 = vmax.f32 %v195, 0.0
    %v210 = vmax.f32 %v200, 0.0
    %v211 = vmax.f32 %v205, 0.0
    %v212 = vadd.f32 %v208, %v209
    %v213 = vadd.f32 %v212, %v210
    %v214 = vadd.f32 %v213, %v211
    %v215 = vrot.slane %v214, 4
    %v216 = vadd.f32 %v214, %v215
    %v217 = vrot.slane %v216, 2
    %v218 = vadd.f32 %v216, %v217
    %v219 = vrot.slane %v218, 1
    %v220 = vadd.f32 %v218, %v219
    %v221 = vrcp.pop 32.0
    %v222 = vmul.f32 %v220, %v221
    %v223 = vmul.f32 %v208, %v208
    %v224 = vmul.f32 %v209, %v209
    %v225 = vmul.f32 %v210, %v210
    %v226 = vmul.f32 %v211, %v211
    %v227 = vadd.f32 %v223, %v224
    %v228 = vadd.f32 %v227, %v225
    %v229 = vadd.f32 %v228, %v226
    %v230 = vrot.slane %v229, 4
    %v231 = vadd.f32 %v229, %v230
    %v232 = vrot.slane %v231, 2
    %v233 = vadd.f32 %v231, %v232
    %v234 = vrot.slane %v233, 1
    %v235 = vadd.f32 %v233, %v234
    %v236 = vmul.f32 %v235, %v221
    %v237 = vmul.f32 %v222, %v222
    %v238 = vsub.f32 %v236, %v237
    %v239 = vmax.f32 %v238, 0.0
    %v240 = vadd.f32 %v239, 1e-05
    %v241 = vrsqrt.pop %v240
    %v242 = vsub.f32 %v208, %v222
    %v243 = vsub.f32 %v209, %v222
    %v244 = vsub.f32 %v210, %v222
    %v245 = vsub.f32 %v211, %v222
    %v246 = vmul.f32 %v242, %v241
    %v247 = vmul.f32 %v243, %v241
    %v248 = vmul.f32 %v244, %v241
    %v249 = vmul.f32 %v245, %v241
    %250 = vset.pattern.permute.xlu0 1
    %251 = vperm.xlu0 %250, %v86
    %v252 = vpop.permute.xlu0 %251
    %254 = vset.pattern.permute.xlu0 1
    %255 = vperm.xlu0 %254, %v87
    %v256 = vpop.permute.xlu0 %255
    %258 = vset.pattern.permute.xlu0 1
    %259 = vperm.xlu0 %258, %v88
    %v260 = vpop.permute.xlu0 %259
    %262 = vset.pattern.permute.xlu0 1
    %263 = vperm.xlu0 %262, %v89
    %v264 = vpop.permute.xlu0 %263
    %v266 = vmul.f32 %v246, %v252
    %v267 = vmul.f32 %v247, %v256
    %v268 = vmul.f32 %v248, %v260
    %v269 = vmul.f32 %v249, %v264
    %270 = vset.pattern.permute.xlu0 2
    %271 = vperm.xlu0 %270, %v86
    %v272 = vpop.permute.xlu0 %271
    %274 = vset.pattern.permute.xlu0 2
    %275 = vperm.xlu0 %274, %v87
    %v276 = vpop.permute.xlu0 %275
    %278 = vset.pattern.permute.xlu0 2
    %279 = vperm.xlu0 %278, %v88
    %v280 = vpop.permute.xlu0 %279
    %282 = vset.pattern.permute.xlu0 2
    %283 = vperm.xlu0 %282, %v89
    %v284 = vpop.permute.xlu0 %283
    %v286 = vadd.f32 %v266, %v272
    %v287 = vadd.f32 %v267, %v276
    %v288 = vadd.f32 %v268, %v280
    %v289 = vadd.f32 %v269, %v284
    %v290 = vld [vmem:[%s3] sm:$0xff]
    %v291 = vld [vmem:[%s3 + $0x8] sm:$0xff]
    %v292 = vld [vmem:[%s3 + $0x10] sm:$0xff]
    %v293 = vld [vmem:[%s3 + $0x18] sm:$0xff]
    %294 = vset.pattern.permute.xlu0 3
    %295 = vperm.xlu0 %294, %v86
    %v296 = vpop.permute.xlu0 %295
    %298 = vset.pattern.permute.xlu0 3
    %299 = vperm.xlu0 %298, %v87
    %v300 = vpop.permute.xlu0 %299
    %302 = vset.pattern.permute.xlu0 3
    %303 = vperm.xlu0 %302, %v88
    %v304 = vpop.permute.xlu0 %303
    %306 = vset.pattern.permute.xlu0 3
    %307 = vperm.xlu0 %306, %v89
    %v308 = vpop.permute.xlu0 %307
    %vm310 = vcmask 261120
    %v312 = vsel %vm310, %v290, 0
    %v315 = vsel %vm310, %v291, 0
    %v318 = vsel %vm310, %v292, 0
    %v321 = vsel %vm310, %v293, 0
    %323 = vmatprep.subr.mxu0 0.0
    %324 = vmatpush1.msra.mxu0 0.0
    %325 = vmatprep.subr.mxu0 0.0
    %326 = vmatpush1.msra.mxu0 0.0
    %327 = vmatprep.subr.mxu0 0.0
    %328 = vmatpush1.msra.mxu0 0.0
    %329 = vmatprep.subr.mxu0 0.0
    %330 = vmatpush1.msra.mxu0 0.0
    %331 = vmatprep.subr.mxu0 0.0
    %332 = vmatpush1.msra.mxu0 0.0
    %333 = vmatprep.subr.mxu0 0.0
    %334 = vmatpush1.msra.mxu0 0.0
    %335 = vmatprep.subr.mxu0 0.0
    %336 = vmatpush1.msra.mxu0 0.0
    %337 = vmatprep.subr.mxu0 0.0
    %338 = vmatpush1.msra.mxu0 0.0
    %339 = vmatprep.subr.mxu0 0.0
    %340 = vmatpush1.msra.mxu0 0.0
    %341 = vmatprep.subr.mxu0 0.0
    %342 = vmatpush1.msra.mxu0 0.0
    %343 = vmatprep.subr.mxu0 0.0
    %344 = vmatpush1.msra.mxu0 0.0
    %345 = vmatprep.subr.mxu0 0.0
    %346 = vmatpush1.msra.mxu0 0.0
    %347 = vmatprep.subr.mxu0 0.0
    %348 = vmatpush1.msra.mxu0 %v289
    %349 = vmatprep.subr.mxu0 0.0
    %350 = vmatpush1.msra.mxu0 %v288
    %351 = vmatprep.subr.mxu0 0.0
    %352 = vmatpush1.msra.mxu0 %v287
    %353 = vmatprep.subr.mxu0 0.0
    %354 = vmatpush1.msra.mxu0 %v286
    %355 = vmatprep.subr.mxu0 0.0
    %356 = vmatpush2.msra.mxu0 0.0
    %357 = vmatprep.subr.mxu0 0.0
    %358 = vmatpush2.msra.mxu0 0.0
    %359 = vmatprep.subr.mxu0 0.0
    %360 = vmatpush2.msra.mxu0 0.0
    %361 = vmatprep.subr.mxu0 0.0
    %362 = vmatpush2.msra.mxu0 0.0
    %363 = vmatprep.subr.mxu0 0.0
    %364 = vmatpush2.msra.mxu0 0.0
    %365 = vmatprep.subr.mxu0 0.0
    %366 = vmatpush2.msra.mxu0 0.0
    %367 = vmatprep.subr.mxu0 0.0
    %368 = vmatpush2.msra.mxu0 0.0
    %369 = vmatprep.subr.mxu0 0.0
    %370 = vmatpush2.msra.mxu0 0.0
    %371 = vmatprep.subr.mxu0 0.0
    %372 = vmatpush2.msra.mxu0 0.0
    %373 = vmatprep.subr.mxu0 0.0
    %374 = vmatpush2.msra.mxu0 0.0
    %375 = vmatprep.subr.mxu0 0.0
    %376 = vmatpush2.msra.mxu0 0.0
    %377 = vmatprep.subr.mxu0 0.0
    %378 = vmatpush2.msra.mxu0 0.0
    %379 = vmatprep.subr.mxu0 0.0
    %380 = vmatpush2.msra.mxu0 0.0
    %381 = vmatprep.subr.mxu0 0.0
    %382 = vmatpush2.msra.mxu0 0.0
    %383 = vmatprep.subr.mxu0 0.0
    %384 = vmatpush2.msra.mxu0 0.0
    %385 = vmatprep.subr.mxu0 0.0
    %386 = vmatpush2.msra.mxu0 0.0
    %387 = vmatprep.mubr.f32.mxu0 0.0
    %388 = vmatmul.mubr.f32.gmra.mxu0 %v312
    %v389 = vpop.f32.mrf.mxu0
    %v390 = vadd.f32 %v296, %v389
    %v391 = vpop.f32.mrf.mxu0
    %392 = vmatprep.mubr.f32.mxu0 0.0
    %393 = vmatmul.mubr.f32.gmra.mxu0 %v315
    %v394 = vpop.f32.mrf.mxu0
    %v395 = vadd.f32 %v300, %v394
    %v396 = vpop.f32.mrf.mxu0
    %397 = vmatprep.mubr.f32.mxu0 0.0
    %398 = vmatmul.mubr.f32.gmra.mxu0 %v318
    %v399 = vpop.f32.mrf.mxu0
    %v400 = vadd.f32 %v304, %v399
    %v401 = vpop.f32.mrf.mxu0
    %402 = vmatprep.mubr.f32.mxu0 0.0
    %403 = vmatmul.mubr.f32.gmra.mxu0 %v321
    %v404 = vpop.f32.mrf.mxu0
    %v405 = vadd.f32 %v308, %v404
    %v406 = vpop.f32.mrf.mxu0
    %407 = vdwg.mxu0
    %v408 = vmax.f32 %v390, 0.0
    %v409 = vmax.f32 %v395, 0.0
    %v410 = vmax.f32 %v400, 0.0
    %v411 = vmax.f32 %v405, 0.0
    %v412 = vadd.f32 %v408, %v409
    %v413 = vadd.f32 %v412, %v410
    %v414 = vadd.f32 %v413, %v411
    %v415 = vrot.slane %v414, 4
    %v416 = vadd.f32 %v414, %v415
    %v417 = vrot.slane %v416, 2
    %v418 = vadd.f32 %v416, %v417
    %v419 = vrot.slane %v418, 1
    %v420 = vadd.f32 %v418, %v419
    %v421 = vmul.f32 %v420, %v221
    %v422 = vmul.f32 %v408, %v408
    %v423 = vmul.f32 %v409, %v409
    %v424 = vmul.f32 %v410, %v410
    %v425 = vmul.f32 %v411, %v411
    %v426 = vadd.f32 %v422, %v423
    %v427 = vadd.f32 %v426, %v424
    %v428 = vadd.f32 %v427, %v425
    %v429 = vrot.slane %v428, 4
    %v430 = vadd.f32 %v428, %v429
    %v431 = vrot.slane %v430, 2
    %v432 = vadd.f32 %v430, %v431
    %v433 = vrot.slane %v432, 1
    %v434 = vadd.f32 %v432, %v433
    %v435 = vmul.f32 %v434, %v221
    %v436 = vmul.f32 %v421, %v421
    %v437 = vsub.f32 %v435, %v436
    %v438 = vmax.f32 %v437, 0.0
    %v439 = vadd.f32 %v438, 1e-05
    %v440 = vrsqrt.pop %v439
    %v441 = vsub.f32 %v408, %v421
    %v442 = vsub.f32 %v409, %v421
    %v443 = vsub.f32 %v410, %v421
    %v444 = vsub.f32 %v411, %v421
    %v445 = vmul.f32 %v441, %v440
    %v446 = vmul.f32 %v442, %v440
    %v447 = vmul.f32 %v443, %v440
    %v448 = vmul.f32 %v444, %v440
    %449 = vset.pattern.permute.xlu0 4
    %450 = vperm.xlu0 %449, %v86
    %v451 = vpop.permute.xlu0 %450
    %453 = vset.pattern.permute.xlu0 4
    %454 = vperm.xlu0 %453, %v87
    %v455 = vpop.permute.xlu0 %454
    %457 = vset.pattern.permute.xlu0 4
    %458 = vperm.xlu0 %457, %v88
    %v459 = vpop.permute.xlu0 %458
    %461 = vset.pattern.permute.xlu0 4
    %462 = vperm.xlu0 %461, %v89
    %v463 = vpop.permute.xlu0 %462
    %v465 = vmul.f32 %v445, %v451
    %v466 = vmul.f32 %v446, %v455
    %v467 = vmul.f32 %v447, %v459
    %v468 = vmul.f32 %v448, %v463
    %469 = vset.pattern.permute.xlu0 5
    %470 = vperm.xlu0 %469, %v86
    %v471 = vpop.permute.xlu0 %470
    %473 = vset.pattern.permute.xlu0 5
    %474 = vperm.xlu0 %473, %v87
    %v475 = vpop.permute.xlu0 %474
    %477 = vset.pattern.permute.xlu0 5
    %478 = vperm.xlu0 %477, %v88
    %v479 = vpop.permute.xlu0 %478
    %481 = vset.pattern.permute.xlu0 5
    %482 = vperm.xlu0 %481, %v89
    %v483 = vpop.permute.xlu0 %482
    %v485 = vadd.f32 %v465, %v471
    %v486 = vadd.f32 %v466, %v475
    %v487 = vadd.f32 %v467, %v479
    %v488 = vadd.f32 %v468, %v483
    %v489 = vld [vmem:[%s5] sm:$0x1]
    %s490 = sld [smem:[#allocation2]]
    %v491 = vstv %s490
    %v493 = vsel %vm310, %v489, 0
    %495 = vmatprep.subr.mxu0 0.0
    %496 = vmatpush1.msra.mxu0 0.0
    %497 = vmatprep.subr.mxu0 0.0
    %498 = vmatpush1.msra.mxu0 0.0
    %499 = vmatprep.subr.mxu0 0.0
    %500 = vmatpush1.msra.mxu0 0.0
    %501 = vmatprep.subr.mxu0 0.0
    %502 = vmatpush1.msra.mxu0 0.0
    %503 = vmatprep.subr.mxu0 0.0
    %504 = vmatpush1.msra.mxu0 0.0
    %505 = vmatprep.subr.mxu0 0.0
    %506 = vmatpush1.msra.mxu0 0.0
    %507 = vmatprep.subr.mxu0 0.0
    %508 = vmatpush1.msra.mxu0 0.0
    %509 = vmatprep.subr.mxu0 0.0
    %510 = vmatpush1.msra.mxu0 0.0
    %511 = vmatprep.subr.mxu0 0.0
    %512 = vmatpush1.msra.mxu0 0.0
    %513 = vmatprep.subr.mxu0 0.0
    %514 = vmatpush1.msra.mxu0 0.0
    %515 = vmatprep.subr.mxu0 0.0
    %516 = vmatpush1.msra.mxu0 0.0
    %517 = vmatprep.subr.mxu0 0.0
    %518 = vmatpush1.msra.mxu0 0.0
    %519 = vmatprep.subr.mxu0 0.0
    %520 = vmatpush1.msra.mxu0 %v488
    %521 = vmatprep.subr.mxu0 0.0
    %522 = vmatpush1.msra.mxu0 %v487
    %523 = vmatprep.subr.mxu0 0.0
    %524 = vmatpush1.msra.mxu0 %v486
    %525 = vmatprep.subr.mxu0 0.0
    %526 = vmatpush1.msra.mxu0 %v485
    %527 = vmatprep.subr.mxu0 0.0
    %528 = vmatpush2.msra.mxu0 0.0
    %529 = vmatprep.subr.mxu0 0.0
    %530 = vmatpush2.msra.mxu0 0.0
    %531 = vmatprep.subr.mxu0 0.0
    %532 = vmatpush2.msra.mxu0 0.0
    %533 = vmatprep.subr.mxu0 0.0
    %534 = vmatpush2.msra.mxu0 0.0
    %535 = vmatprep.subr.mxu0 0.0
    %536 = vmatpush2.msra.mxu0 0.0
    %537 = vmatprep.subr.mxu0 0.0
    %538 = vmatpush2.msra.mxu0 0.0
    %539 = vmatprep.subr.mxu0 0.0
    %540 = vmatpush2.msra.mxu0 0.0
    %541 = vmatprep.subr.mxu0 0.0
    %542 = vmatpush2.msra.mxu0 0.0
    %543 = vmatprep.subr.mxu0 0.0
    %544 = vmatpush2.msra.mxu0 0.0
    %545 = vmatprep.subr.mxu0 0.0
    %546 = vmatpush2.msra.mxu0 0.0
    %547 = vmatprep.subr.mxu0 0.0
    %548 = vmatpush2.msra.mxu0 0.0
    %549 = vmatprep.subr.mxu0 0.0
    %550 = vmatpush2.msra.mxu0 0.0
    %551 = vmatprep.subr.mxu0 0.0
    %552 = vmatpush2.msra.mxu0 0.0
    %553 = vmatprep.subr.mxu0 0.0
    %554 = vmatpush2.msra.mxu0 0.0
    %555 = vmatprep.subr.mxu0 0.0
    %556 = vmatpush2.msra.mxu0 0.0
    %557 = vmatprep.subr.mxu0 0.0
    %558 = vmatpush2.msra.mxu0 0.0
    %559 = vmatprep.mubr.f32.mxu0 0.0
    %560 = vmatmul.mubr.f32.gmra.mxu0 %v493
    %v561 = vpop.f32.mrf.mxu0
    %v562 = vadd.f32 %v491, %v561
    %v563 = vpop.f32.mrf.mxu0
    %564 = vdwg.mxu0
    %565 = vst [vmem:[#allocation3] sm:$0x1] %v562
    // Predicated region
    $region30: #{tpu_custom_call.1} parent=1 // pred_check
      _
    $region31: #{tpu_custom_call.1} parent=1 // pred_check_branch
      %567 = sbr.rel (0) target = $region33
    $region32: #{tpu_custom_call.1} parent=1 // pred_region
      %s569 = ssub.s32 16, 16
      %570 = vsyncadd [#allocation4], %s569
      %s572 = sshll.u32 [#allocation3], 4
      %s573 = int_to_ptr.vmem [resolvable:$true] %s572
      %575 = dma.vmem_to_hbm [thread:$0]  %s573, 16, %s7, [#allocation4]
    $region33: #{tpu_custom_call.1} parent=1 // pred_fallthru
      _
    // Predicated region
    $region34: #{tpu_custom_call.1} parent=1 // pred_check
      _
    $region35: #{tpu_custom_call.1} parent=1 // pred_check_branch
      %577 = sbr.rel (0) target = $region37
    $region36: #{tpu_custom_call.1} parent=1 // pred_region
      %578 = dma.done [#allocation4], 16
    $region37: #{tpu_custom_call.1} parent=1 // pred_fallthru
      _
    %579 = vsyncpa [#allocation4], 1

</llo_original>
